<compile_context>
chip_gen: v6e
topology: v6e:2x2x1
jax: 0.10.0
libtpu: 0.0.40
codegen_flags: <defaults>
</compile_context>

<pallas_src>
import functools

import jax
import jax.numpy as jnp
from jax.experimental import pallas as pl
from jax.experimental.pallas import tpu as pltpu


def _round_up(x, m):
    return ((x + m - 1) // m) * m


def _qcritic_kernel(n_hidden, n_out, obs_ref, act_ref, *refs):
    """Full MLP forward for one batch tile.

    refs = (W1_obs, W1_act, b1, [W_i, b_i]*(n_hidden-1), W_out_T, b_out_T, out_ref)
    Weights [in, out] f32; biases [1, out] f32; W_out_T [n_out, H] f32;
    b_out_T [n_out, 1] f32; out_ref [n_out, TB] f32 (batch on the lane axis).
    """
    out_ref = refs[-1]
    w1o_ref, w1a_ref, b1_ref = refs[0], refs[1], refs[2]

    # Layer 1 with the obs/action concat fused as a row-split of W1 (MXU, f32).
    h = jnp.dot(obs_ref[...], w1o_ref[...], preferred_element_type=jnp.float32)
    h = h + jnp.dot(act_ref[...], w1a_ref[...], preferred_element_type=jnp.float32)
    h = jnp.maximum(h + b1_ref[...], 0.0)

    # Remaining hidden layers: f32 matmul + bias + ReLU.
    idx = 3
    for _ in range(n_hidden - 1):
        w_ref, b_ref = refs[idx], refs[idx + 1]
        idx += 2
        h = jnp.dot(h, w_ref[...], preferred_element_type=jnp.float32)
        h = jnp.maximum(h + b_ref[...], 0.0)

    # Output head (n_out = 1 or 2): VPU multiply + lane reduction per output,
    # laid out lane-dense as (n_out, TB) so the store is unmasked.
    wout_ref, bout_ref = refs[idx], refs[idx + 1]
    tb = h.shape[0]
    cols = []
    for j in range(n_out):
        w_row = wout_ref[pl.ds(j, 1), :]                 # (1, H_last)
        q_j = jnp.sum(h * w_row, axis=-1)                # (TB,)
        cols.append(q_j.reshape(1, tb))                  # (1, TB), batch on lanes
    q = cols[0] if n_out == 1 else jnp.concatenate(cols, axis=0)
    out_ref[...] = q + bout_ref[...]                     # (n_out, TB) + (n_out, 1)


def init_qcritic_params(key, dim_obs, dim_action, dims_hidden=(64, 64)):
    """Xavier-uniform weights / zero biases, matching the PyTorch init.

    Weights stored as [in, out] (transposed vs. torch's [out, in]).
    """
    n_neurons = (dim_obs + dim_action,) + tuple(dims_hidden) + (1,)
    params = []
    for dim_in, dim_out in zip(n_neurons[:-1], n_neurons[1:]):
        key, sub = jax.random.split(key)
        bound = (6.0 / (dim_in + dim_out)) ** 0.5
        w = jax.random.uniform(
            sub, (dim_in, dim_out), dtype=jnp.float32, minval=-bound, maxval=bound
        )
        b = jnp.zeros((1, dim_out), dtype=jnp.float32)
        params.append((w, b))
    return params


def merge_twin_critic_params(params_q1, params_q2):
    """Merge SAC's twin critics into one block-diagonal MLP (shared input, 2-wide head)."""
    merged = []
    for i, ((w1, b1), (w2, b2)) in enumerate(zip(params_q1, params_q2)):
        if i == 0:
            w = jnp.concatenate([w1, w2], axis=1)            # both see the same x
        else:
            w = jax.scipy.linalg.block_diag(w1, w2)          # critics stay independent
        b = jnp.concatenate([b1, b2], axis=1)
        merged.append((w, b))
    return merged


def qcritic_forward(obs, action, params, *, block_batch=4096):
    """Pallas-backed forward. obs: [B, dim_obs], action: [B, dim_action] -> [B, n_out] f32."""
    B, dim_obs = obs.shape
    dim_action = action.shape[1]
    n_hidden = len(params) - 1
    n_out = params[-1][0].shape[1]

    # Batch tile: multiple of 128 so the (n_out, TB) output block is lane-aligned,
    # and at least 2 grid steps so v7x's second TensorCore gets work.
    bb = max(128, (block_batch // 128) * 128)
    TB = min(bb, max(128, _round_up(pl.cdiv(B, 2), 128)))
    G = max(2, pl.cdiv(B, TB))
    Bp = G * TB

    obs_f = obs.astype(jnp.float32)
    act_f = action.astype(jnp.float32)
    if Bp != B:
        obs_f = jnp.pad(obs_f, ((0, Bp - B), (0, 0)))
        act_f = jnp.pad(act_f, ((0, Bp - B), (0, 0)))

    # Params: W1 row-split (fused concat); output head as [n_out, H] row(s) + [n_out, 1] bias.
    w1, b1 = params[0]
    flat = [w1[:dim_obs], w1[dim_obs:], b1]
    for w, b in params[1:-1]:
        flat.extend([w, b])
    w_out, b_out = params[-1]
    flat.extend([w_out.T, b_out.T])
    flat = [p.astype(jnp.float32) for p in flat]

    grid = (G,)
    in_specs = [
        pl.BlockSpec((TB, dim_obs), lambda i: (i, 0)),
        pl.BlockSpec((TB, dim_action), lambda i: (i, 0)),
    ]
    # Constant index_map -> params DMA'd once, VMEM-resident across grid steps.
    in_specs += [pl.BlockSpec(p.shape, lambda i: (0, 0)) for p in flat]
    # Lane-dense output block: batch on the lane axis (unmasked stores, contiguous writeback).
    out_spec = pl.BlockSpec((n_out, TB), lambda i: (0, i))

    # Advisory cost hint for XLA scheduling around this small custom call.
    dims = [dim_obs + dim_action] + [w.shape[1] for w, _ in params]
    flops = 2 * Bp * sum(a * b for a, b in zip(dims[:-1], dims[1:]))
    bytes_accessed = (
        (int(obs_f.size) + int(act_f.size)) * 4
        + sum(int(p.size) * 4 for p in flat)
        + n_out * Bp * 4
    )

    kernel = functools.partial(_qcritic_kernel, n_hidden, n_out)
    out = pl.pallas_call(
        kernel,
        out_shape=jax.ShapeDtypeStruct((n_out, Bp), jnp.float32),
        grid=grid,
        in_specs=in_specs,
        out_specs=out_spec,
        compiler_params=pltpu.CompilerParams(
            dimension_semantics=("parallel",)
        ),
        cost_estimate=pl.CostEstimate(
            flops=flops, transcendentals=0, bytes_accessed=bytes_accessed
        ),
    )(obs_f, act_f, *flat)
    return out[:, :B].T  # (B, n_out); padded rows dropped


def qcritic_twin_forward(obs, action, params_q1, params_q2, *, block_batch=4096):
    """Both SAC critics in one pallas_call (shared obs/act read, 128-wide hiddens)."""
    merged = merge_twin_critic_params(params_q1, params_q2)
    q = qcritic_forward(obs, action, merged, block_batch=block_batch)  # (B, 2)
    return q[:, :1], q[:, 1:]


def _reference_forward_f32(obs, action, params):
    """Pure-JAX f32 reference with the PyTorch module structure."""
    x = jnp.concatenate([obs, action], axis=1).astype(jnp.float32)
    for w, b in params[:-1]:
        x = jnp.maximum(x @ w + b, 0.0)
    w, b = params[-1]
    return x @ w + b


if __name__ == "__main__":
    key = jax.random.PRNGKey(0)
    k_p1, k_p2, k_obs, k_act = jax.random.split(key, 4)

    batch = 8
    dim_obs = 24
    dim_action = 8
    dims_hidden = (64, 64)

    params = init_qcritic_params(k_p1, dim_obs, dim_action, dims_hidden)
    obs = jax.random.normal(k_obs, (batch, dim_obs), dtype=jnp.float32)
    action = jax.random.normal(k_act, (batch, dim_action), dtype=jnp.float32)

    # Single critic (matches the PyTorch module: [B, 1] output).
    q = jax.block_until_ready(qcritic_forward(obs, action, params))
    assert q.shape == (batch, 1), q.shape
    q_ref = _reference_forward_f32(obs, action, params)
    assert jnp.allclose(q, q_ref, atol=2e-2, rtol=2e-2), (q, q_ref)

    # Fused twin critics (SAC Q1/Q2) through the same kernel.
    params2 = init_qcritic_params(k_p2, dim_obs, dim_action, dims_hidden)
    q1, q2 = qcritic_twin_forward(obs, action, params, params2)
    q1, q2 = jax.block_until_ready((q1, q2))
    assert q1.shape == (batch, 1) and q2.shape == (batch, 1), (q1.shape, q2.shape)
    q2_ref = _reference_forward_f32(obs, action, params2)
    assert jnp.allclose(q1, q_ref, atol=2e-2, rtol=2e-2), (q1, q_ref)
    assert jnp.allclose(q2, q2_ref, atol=2e-2, rtol=2e-2), (q2, q2_ref)

    print("KERNEL_OK")
</pallas_src>

<mosaic_0001>
module attributes {stable_mosaic.version = 11 : i64} {
  func.func @_qcritic_kernel(%arg0: i32, %arg1: memref<128x24xf32, #tpu.memory_space<vmem>>, %arg2: memref<128x8xf32, #tpu.memory_space<vmem>>, %arg3: memref<24x64xf32, #tpu.memory_space<vmem>>, %arg4: memref<8x64xf32, #tpu.memory_space<vmem>>, %arg5: memref<1x64xf32, #tpu.memory_space<vmem>>, %arg6: memref<64x64xf32, #tpu.memory_space<vmem>>, %arg7: memref<1x64xf32, #tpu.memory_space<vmem>>, %arg8: memref<1x64xf32, #tpu.memory_space<vmem>>, %arg9: memref<1x1xf32, #tpu.memory_space<vmem>>, %arg10: memref<1x128xf32, #tpu.memory_space<vmem>>) attributes {dimension_semantics = [#tpu.dimension_semantics<parallel>], iteration_bounds = array<i64: 2>, scalar_prefetch = 0 : i64, scratch_operands = 0 : i64, tpu.core_type = #tpu.core_type<tc>, window_params = [{transform_indices = @transform_0, window_bounds = array<i64: 128, 24>}, {transform_indices = @transform_1, window_bounds = array<i64: 128, 8>}, {pipeline_mode = #tpu.pipeline_mode<synchronous>, transform_indices = @transform_2, window_bounds = array<i64: 24, 64>}, {pipeline_mode = #tpu.pipeline_mode<synchronous>, transform_indices = @transform_3, window_bounds = array<i64: 8, 64>}, {pipeline_mode = #tpu.pipeline_mode<synchronous>, transform_indices = @transform_4, window_bounds = array<i64: 1, 64>}, {pipeline_mode = #tpu.pipeline_mode<synchronous>, transform_indices = @transform_5, window_bounds = array<i64: 64, 64>}, {pipeline_mode = #tpu.pipeline_mode<synchronous>, transform_indices = @transform_6, window_bounds = array<i64: 1, 64>}, {pipeline_mode = #tpu.pipeline_mode<synchronous>, transform_indices = @transform_7, window_bounds = array<i64: 1, 64>}, {pipeline_mode = #tpu.pipeline_mode<synchronous>, transform_indices = @transform_8, window_bounds = array<i64: 1, 1>}, {transform_indices = @transform_9, window_bounds = array<i64: 1, 128>}]} {
    %c0 = arith.constant 0 : index
    %c0_0 = arith.constant 0 : index
    %0 = vector.load %arg1[%c0, %c0_0] : memref<128x24xf32, #tpu.memory_space<vmem>>, vector<128x24xf32>
    %c0_1 = arith.constant 0 : index
    %c0_2 = arith.constant 0 : index
    %1 = vector.load %arg3[%c0_1, %c0_2] : memref<24x64xf32, #tpu.memory_space<vmem>>, vector<24x64xf32>
    %cst = arith.constant dense<0.000000e+00> : vector<128x64xf32>
    %2 = tpu.matmul %0, %1, %cst {dimension_numbers = #tpu.dot_dimension_numbers<[1], [0], [0], [1], [0, 0, 1, 1], [], []>} : vector<128x24xf32>, vector<24x64xf32>, vector<128x64xf32> -> vector<128x64xf32>
    %c0_3 = arith.constant 0 : index
    %c0_4 = arith.constant 0 : index
    %3 = vector.load %arg2[%c0_3, %c0_4] : memref<128x8xf32, #tpu.memory_space<vmem>>, vector<128x8xf32>
    %c0_5 = arith.constant 0 : index
    %c0_6 = arith.constant 0 : index
    %4 = vector.load %arg4[%c0_5, %c0_6] : memref<8x64xf32, #tpu.memory_space<vmem>>, vector<8x64xf32>
    %cst_7 = arith.constant dense<0.000000e+00> : vector<128x64xf32>
    %5 = tpu.matmul %3, %4, %cst_7 {dimension_numbers = #tpu.dot_dimension_numbers<[1], [0], [0], [1], [0, 0, 1, 1], [], []>} : vector<128x8xf32>, vector<8x64xf32>, vector<128x64xf32> -> vector<128x64xf32>
    %6 = arith.addf %2, %5 : vector<128x64xf32>
    %c0_8 = arith.constant 0 : index
    %c0_9 = arith.constant 0 : index
    %7 = vector.load %arg5[%c0_8, %c0_9] : memref<1x64xf32, #tpu.memory_space<vmem>>, vector<1x64xf32>
    %8 = vector.broadcast %7 : vector<1x64xf32> to vector<128x64xf32>
    %9 = arith.addf %6, %8 : vector<128x64xf32>
    %cst_10 = arith.constant 0.000000e+00 : f32
    %10 = vector.broadcast %cst_10 : f32 to vector<128x64xf32>
    %11 = arith.maximumf %9, %10 : vector<128x64xf32>
    %c0_11 = arith.constant 0 : index
    %c0_12 = arith.constant 0 : index
    %12 = vector.load %arg6[%c0_11, %c0_12] : memref<64x64xf32, #tpu.memory_space<vmem>>, vector<64x64xf32>
    %cst_13 = arith.constant dense<0.000000e+00> : vector<128x64xf32>
    %13 = tpu.matmul %11, %12, %cst_13 {dimension_numbers = #tpu.dot_dimension_numbers<[1], [0], [0], [1], [0, 0, 1, 1], [], []>} : vector<128x64xf32>, vector<64x64xf32>, vector<128x64xf32> -> vector<128x64xf32>
    %c0_14 = arith.constant 0 : index
    %c0_15 = arith.constant 0 : index
    %14 = vector.load %arg7[%c0_14, %c0_15] : memref<1x64xf32, #tpu.memory_space<vmem>>, vector<1x64xf32>
    %15 = vector.broadcast %14 : vector<1x64xf32> to vector<128x64xf32>
    %16 = arith.addf %13, %15 : vector<128x64xf32>
    %cst_16 = arith.constant 0.000000e+00 : f32
    %17 = vector.broadcast %cst_16 : f32 to vector<128x64xf32>
    %18 = arith.maximumf %16, %17 : vector<128x64xf32>
    %c0_17 = arith.constant 0 : index
    %c0_18 = arith.constant 0 : index
    %19 = vector.load %arg8[%c0_17, %c0_18] : memref<1x64xf32, #tpu.memory_space<vmem>>, vector<1x64xf32>
    %20 = vector.broadcast %19 : vector<1x64xf32> to vector<128x64xf32>
    %21 = arith.mulf %18, %20 : vector<128x64xf32>
    %cst_19 = arith.constant dense<0.000000e+00> : vector<128xf32>
    %22 = vector.multi_reduction <add>, %21, %cst_19 [1] : vector<128x64xf32> to vector<128xf32>
    %23 = vector.shape_cast %22 : vector<128xf32> to vector<1x128xf32>
    %c0_20 = arith.constant 0 : index
    %c0_21 = arith.constant 0 : index
    %24 = vector.load %arg9[%c0_20, %c0_21] : memref<1x1xf32, #tpu.memory_space<vmem>>, vector<1x1xf32>
    %25 = vector.broadcast %24 : vector<1x1xf32> to vector<1x128xf32>
    %26 = arith.addf %23, %25 : vector<1x128xf32>
    %c0_22 = arith.constant 0 : index
    %c0_23 = arith.constant 0 : index
    %27 = vector.load %arg10[%c0_22, %c0_23] : memref<1x128xf32, #tpu.memory_space<vmem>>, vector<1x128xf32>
    tpu.vector_store %arg10[%c0_22, %c0_23], %26 {strides = array<i32>} : memref<1x128xf32, #tpu.memory_space<vmem>>, vector<1x128xf32>,
    return
  }
  func.func @transform_0(%arg0: i32) -> (i32, i32) {
    %c0_i32 = arith.constant 0 : i32
    %c0_i32_0 = arith.constant 0 : i32
    return %arg0, %c0_i32 : i32, i32
  }
  func.func @transform_1(%arg0: i32) -> (i32, i32) {
    %c0_i32 = arith.constant 0 : i32
    %c0_i32_0 = arith.constant 0 : i32
    return %arg0, %c0_i32 : i32, i32
  }
  func.func @transform_2(%arg0: i32) -> (i32, i32) {
    %c0_i32 = arith.constant 0 : i32
    %c0_i32_0 = arith.constant 0 : i32
    %c0_i32_1 = arith.constant 0 : i32
    return %c0_i32, %c0_i32_0 : i32, i32
  }
  func.func @transform_3(%arg0: i32) -> (i32, i32) {
    %c0_i32 = arith.constant 0 : i32
    %c0_i32_0 = arith.constant 0 : i32
    %c0_i32_1 = arith.constant 0 : i32
    return %c0_i32, %c0_i32_0 : i32, i32
  }
  func.func @transform_4(%arg0: i32) -> (i32, i32) {
    %c0_i32 = arith.constant 0 : i32
    %c0_i32_0 = arith.constant 0 : i32
    %c0_i32_1 = arith.constant 0 : i32
    return %c0_i32, %c0_i32_0 : i32, i32
  }
  func.func @transform_5(%arg0: i32) -> (i32, i32) {
    %c0_i32 = arith.constant 0 : i32
    %c0_i32_0 = arith.constant 0 : i32
    %c0_i32_1 = arith.constant 0 : i32
    return %c0_i32, %c0_i32_0 : i32, i32
  }
  func.func @transform_6(%arg0: i32) -> (i32, i32) {
    %c0_i32 = arith.constant 0 : i32
    %c0_i32_0 = arith.constant 0 : i32
    %c0_i32_1 = arith.constant 0 : i32
    return %c0_i32, %c0_i32_0 : i32, i32
  }
  func.func @transform_7(%arg0: i32) -> (i32, i32) {
    %c0_i32 = arith.constant 0 : i32
    %c0_i32_0 = arith.constant 0 : i32
    %c0_i32_1 = arith.constant 0 : i32
    return %c0_i32, %c0_i32_0 : i32, i32
  }
  func.func @transform_8(%arg0: i32) -> (i32, i32) {
    %c0_i32 = arith.constant 0 : i32
    %c0_i32_0 = arith.constant 0 : i32
    %c0_i32_1 = arith.constant 0 : i32
    return %c0_i32, %c0_i32_0 : i32, i32
  }
  func.func @transform_9(%arg0: i32) -> (i32, i32) {
    %c0_i32 = arith.constant 0 : i32
    %c0_i32_0 = arith.constant 0 : i32
    return %c0_i32, %arg0 : i32, i32
  }
}

</mosaic_0001>

<llo_original>
// kernel: tpu_custom_call.1
$region0: #{tpu_custom_call.1}
  #allocation0 [shape = 'u32[]', space=smem, size = 0x4, offset = 0x4, fixed_abs, tag = 'smem constant byte address 0x4 - core index']
  #allocation1 [shape = 'u32[144,128]{1,0:T(1,128)}', space=vmem, size = 0x12000, scoped, tag = 'internal scratch']
  #allocation2 [shape = 'f32[1,1]{1,0:T(1,128)S(1)}', space=vmem, size = 0x200, scoped, tag = 'scoped memory for tpu_custom_call.1']
  %s0 = inlined_call_operand.vmem [shape: f32[256,24], index: 0, kind: input, shape index: {}]
  %s1 = inlined_call_operand.vmem [shape: f32[256,8], index: 1, kind: input, shape index: {}]
  %s2 = inlined_call_operand.vmem [shape: f32[24,64], index: 2, kind: input, shape index: {}]
  %s3 = inlined_call_operand.vmem [shape: f32[8,64], index: 3, kind: input, shape index: {}]
  %s4 = inlined_call_operand.vmem [shape: f32[1,64], index: 4, kind: input, shape index: {}]
  %s5 = inlined_call_operand.vmem [shape: f32[64,64], index: 5, kind: input, shape index: {}]
  %s6 = inlined_call_operand.vmem [shape: f32[1,64], index: 6, kind: input, shape index: {}]
  %s7 = inlined_call_operand.vmem [shape: f32[1,64], index: 7, kind: input, shape index: {}]
  %s8 = inlined_call_operand.<no memory space> [shape: f32[1,1], index: 8, kind: input, shape index: {}]
  %s9 = inlined_call_operand.hbm [shape: f32[1,256], index: 9, kind: output, shape index: {}]
  %s10 = sld [smem:[#allocation0]]
  $region69: #{tpu_custom_call.1} parent=0
    _
  %s12 = ssub.s32 1, %s10
  %s13 = scalar_select 0, %s12, %s10
  %v14 = vstv %s8
  %15 = vst [vmem:[#allocation2] sm:$0x1] %v14
  $region1: #{tpu_custom_call.1} parent=0
    #allocation3 [shape = 'u8[1024]{0}', space=vmem, size = 0x400, scoped, tag = 'output window, operand 0']
    #allocation4 [shape = 's32[2]{0}', space=sflag, size = 0x8, scoped, tag = 'scoped memory for tpu_custom_call.1']
    %16 = vsyncpa [#allocation4], 0
    %s17 = scalar_lea.sflag [#allocation4], 1
    %18 = vsyncpa %s17, 0
    loop: start=0, step=1, limit=4
    $region2: #{tpu_custom_call.1} parent=1 // loop_pre_header
      _
    $region3: #{tpu_custom_call.1} parent=1 // loop_header
      %s20 = sphi 0, %s24
      %p21 = scmp.ge.s32.totalorder %s20, 4
      %s30 = sphi 0, %s32
      %s33 = sphi 0, %s30
      %s34 = sphi 0, %s33
      %s50 = sphi 0, %s34
      %s56 = sphi 0, %s58
      %s59 = sphi 0, %s56
      %s60 = sphi 0, %s59
      %s76 = sphi 0, %s60
      %s80 = sphi 0, %s80
      %s82 = sphi 0, %s80
      %s83 = sphi 0, %s82
      %s97 = sphi 0, %s83
      %s101 = sphi 0, %s101
      %s103 = sphi 0, %s101
      %s104 = sphi 0, %s103
      %s118 = sphi 0, %s104
      %s122 = sphi 0, %s122
      %s124 = sphi 0, %s122
      %s125 = sphi 0, %s124
      %s139 = sphi 0, %s125
      %s143 = sphi 0, %s143
      %s145 = sphi 0, %s143
      %s146 = sphi 0, %s145
      %s160 = sphi 0, %s146
      %s164 = sphi 0, %s164
      %s166 = sphi 0, %s164
      %s167 = sphi 0, %s166
      %s181 = sphi 0, %s167
      %s185 = sphi 0, %s185
      %s187 = sphi 0, %s185
      %s188 = sphi 0, %s187
      %s202 = sphi 0, %s188
      %s206 = sphi 0, %s206
      %s208 = sphi 0, %s206
      %s209 = sphi 0, %s208
      %s223 = sphi 0, %s209
      %s229 = sphi 0, %s231
      %s232 = sphi 0, %s229
      %s233 = sphi 0, %s232
      %s249 = sphi 0, %s233
    $region4: #{tpu_custom_call.1} parent=1 // loop_header_branch
      %23 = sbr.rel (%p21) target = $region8
    $region5: #{tpu_custom_call.1} parent=1 // loop_body
      %s25 = ssub.s32 %s20, 1
      %s26 = ssub.s32 %s20, 2
      %s27 = sadd.s32 %s20, 1
      %s28 = ssub.s32 %s20, %s27
      %p29 = scmp.eq.s32.totalorder %s28, 0
      %s31 = sadd.s32 %s30, 1
      %s32 = scalar_select %p29, %s30, %s31
      %p35 = pneg %p29
      %p36 = scmp.eq.s32.totalorder %s20, 1
      %p37 = por %p35, %p36
      %p38 = scmp.ne.s32.totalorder %s30, %s33
      %p39 = scmp.eq.s32.totalorder %s20, 0
      %p40 = por %p38, %p39
      %p41 = scmp.ne.s32.totalorder %s30, %s33
      %p42 = scmp.eq.s32.totalorder %s25, 1
      %p43 = por %p41, %p42
      %p44 = scmp.ne.s32.totalorder %s33, %s34
      %p45 = scmp.eq.s32.totalorder %s25, 0
      %p46 = por %p44, %p45
      %p47 = scmp.ne.s32.totalorder %s33, %s34
      %p48 = scmp.eq.s32.totalorder %s26, 1
      %p49 = por %p47, %p48
      %p51 = scmp.ne.s32.totalorder %s34, %s50
      %p52 = scmp.eq.s32.totalorder %s26, 0
      %p53 = por %p51, %p52
      %s54 = ssub.s32 %s20, %s27
      %p55 = scmp.eq.s32.totalorder %s54, 0
      %s57 = sadd.s32 %s56, 1
      %s58 = scalar_select %p55, %s56, %s57
      %p61 = pneg %p55
      %p62 = scmp.eq.s32.totalorder %s20, 1
      %p63 = por %p61, %p62
      %p64 = scmp.ne.s32.totalorder %s56, %s59
      %p65 = scmp.eq.s32.totalorder %s20, 0
      %p66 = por %p64, %p65
      %p67 = scmp.ne.s32.totalorder %s56, %s59
      %p68 = scmp.eq.s32.totalorder %s25, 1
      %p69 = por %p67, %p68
      %p70 = scmp.ne.s32.totalorder %s59, %s60
      %p71 = scmp.eq.s32.totalorder %s25, 0
      %p72 = por %p70, %p71
      %p73 = scmp.ne.s32.totalorder %s59, %s60
      %p74 = scmp.eq.s32.totalorder %s26, 1
      %p75 = por %p73, %p74
      %p77 = scmp.ne.s32.totalorder %s60, %s76
      %p78 = scmp.eq.s32.totalorder %s26, 0
      %p79 = por %p77, %p78
      %s81 = sadd.s32 %s80, 1
      %p84 = scmp.eq.s32.totalorder %s20, 1
      %p85 = scmp.ne.s32.totalorder %s80, %s82
      %p86 = scmp.eq.s32.totalorder %s20, 0
      %p87 = por %p85, %p86
      %p88 = scmp.ne.s32.totalorder %s80, %s82
      %p89 = scmp.eq.s32.totalorder %s25, 1
      %p90 = por %p88, %p89
      %p91 = scmp.ne.s32.totalorder %s82, %s83
      %p92 = scmp.eq.s32.totalorder %s25, 0
      %p93 = por %p91, %p92
      %p94 = scmp.ne.s32.totalorder %s82, %s83
      %p95 = scmp.eq.s32.totalorder %s26, 1
      %p96 = por %p94, %p95
      %p98 = scmp.ne.s32.totalorder %s83, %s97
      %p99 = scmp.eq.s32.totalorder %s26, 0
      %p100 = por %p98, %p99
      %s102 = sadd.s32 %s101, 1
      %p105 = scmp.eq.s32.totalorder %s20, 1
      %p106 = scmp.ne.s32.totalorder %s101, %s103
      %p107 = scmp.eq.s32.totalorder %s20, 0
      %p108 = por %p106, %p107
      %p109 = scmp.ne.s32.totalorder %s101, %s103
      %p110 = scmp.eq.s32.totalorder %s25, 1
      %p111 = por %p109, %p110
      %p112 = scmp.ne.s32.totalorder %s103, %s104
      %p113 = scmp.eq.s32.totalorder %s25, 0
      %p114 = por %p112, %p113
      %p115 = scmp.ne.s32.totalorder %s103, %s104
      %p116 = scmp.eq.s32.totalorder %s26, 1
      %p117 = por %p115, %p116
      %p119 = scmp.ne.s32.totalorder %s104, %s118
      %p120 = scmp.eq.s32.totalorder %s26, 0
      %p121 = por %p119, %p120
      %s123 = sadd.s32 %s122, 1
      %p126 = scmp.eq.s32.totalorder %s20, 1
      %p127 = scmp.ne.s32.totalorder %s122, %s124
      %p128 = scmp.eq.s32.totalorder %s20, 0
      %p129 = por %p127, %p128
      %p130 = scmp.ne.s32.totalorder %s122, %s124
      %p131 = scmp.eq.s32.totalorder %s25, 1
      %p132 = por %p130, %p131
      %p133 = scmp.ne.s32.totalorder %s124, %s125
      %p134 = scmp.eq.s32.totalorder %s25, 0
      %p135 = por %p133, %p134
      %p136 = scmp.ne.s32.totalorder %s124, %s125
      %p137 = scmp.eq.s32.totalorder %s26, 1
      %p138 = por %p136, %p137
      %p140 = scmp.ne.s32.totalorder %s125, %s139
      %p141 = scmp.eq.s32.totalorder %s26, 0
      %p142 = por %p140, %p141
      %s144 = sadd.s32 %s143, 1
      %p147 = scmp.eq.s32.totalorder %s20, 1
      %p148 = scmp.ne.s32.totalorder %s143, %s145
      %p149 = scmp.eq.s32.totalorder %s20, 0
      %p150 = por %p148, %p149
      %p151 = scmp.ne.s32.totalorder %s143, %s145
      %p152 = scmp.eq.s32.totalorder %s25, 1
      %p153 = por %p151, %p152
      %p154 = scmp.ne.s32.totalorder %s145, %s146
      %p155 = scmp.eq.s32.totalorder %s25, 0
      %p156 = por %p154, %p155
      %p157 = scmp.ne.s32.totalorder %s145, %s146
      %p158 = scmp.eq.s32.totalorder %s26, 1
      %p159 = por %p157, %p158
      %p161 = scmp.ne.s32.totalorder %s146, %s160
      %p162 = scmp.eq.s32.totalorder %s26, 0
      %p163 = por %p161, %p162
      %s165 = sadd.s32 %s164, 1
      %p168 = scmp.eq.s32.totalorder %s20, 1
      %p169 = scmp.ne.s32.totalorder %s164, %s166
      %p170 = scmp.eq.s32.totalorder %s20, 0
      %p171 = por %p169, %p170
      %p172 = scmp.ne.s32.totalorder %s164, %s166
      %p173 = scmp.eq.s32.totalorder %s25, 1
      %p174 = por %p172, %p173
      %p175 = scmp.ne.s32.totalorder %s166, %s167
      %p176 = scmp.eq.s32.totalorder %s25, 0
      %p177 = por %p175, %p176
      %p178 = scmp.ne.s32.totalorder %s166, %s167
      %p179 = scmp.eq.s32.totalorder %s26, 1
      %p180 = por %p178, %p179
      %p182 = scmp.ne.s32.totalorder %s167, %s181
      %p183 = scmp.eq.s32.totalorder %s26, 0
      %p184 = por %p182, %p183
      %s186 = sadd.s32 %s185, 1
      %p189 = scmp.eq.s32.totalorder %s20, 1
      %p190 = scmp.ne.s32.totalorder %s185, %s187
      %p191 = scmp.eq.s32.totalorder %s20, 0
      %p192 = por %p190, %p191
      %p193 = scmp.ne.s32.totalorder %s185, %s187
      %p194 = scmp.eq.s32.totalorder %s25, 1
      %p195 = por %p193, %p194
      %p196 = scmp.ne.s32.totalorder %s187, %s188
      %p197 = scmp.eq.s32.totalorder %s25, 0
      %p198 = por %p196, %p197
      %p199 = scmp.ne.s32.totalorder %s187, %s188
      %p200 = scmp.eq.s32.totalorder %s26, 1
      %p201 = por %p199, %p200
      %p203 = scmp.ne.s32.totalorder %s188, %s202
      %p204 = scmp.eq.s32.totalorder %s26, 0
      %p205 = por %p203, %p204
      %s207 = sadd.s32 %s206, 1
      %p210 = scmp.eq.s32.totalorder %s20, 1
      %p211 = scmp.ne.s32.totalorder %s206, %s208
      %p212 = scmp.eq.s32.totalorder %s20, 0
      %p213 = por %p211, %p212
      %p214 = scmp.ne.s32.totalorder %s206, %s208
      %p215 = scmp.eq.s32.totalorder %s25, 1
      %p216 = por %p214, %p215
      %p217 = scmp.ne.s32.totalorder %s208, %s209
      %p218 = scmp.eq.s32.totalorder %s25, 0
      %p219 = por %p217, %p218
      %p220 = scmp.ne.s32.totalorder %s208, %s209
      %p221 = scmp.eq.s32.totalorder %s26, 1
      %p222 = por %p220, %p221
      %p224 = scmp.ne.s32.totalorder %s209, %s223
      %p225 = scmp.eq.s32.totalorder %s26, 0
      %p226 = por %p224, %p225
      %s227 = ssub.s32 %s20, %s27
      %p228 = scmp.eq.s32.totalorder %s227, 0
      %s230 = sadd.s32 %s229, 1
      %s231 = scalar_select %p228, %s229, %s230
      %p234 = pneg %p228
      %p235 = scmp.eq.s32.totalorder %s20, 1
      %p236 = por %p234, %p235
      %p237 = scmp.ne.s32.totalorder %s229, %s232
      %p238 = scmp.eq.s32.totalorder %s20, 0
      %p239 = por %p237, %p238
      %p240 = scmp.ne.s32.totalorder %s229, %s232
      %p241 = scmp.eq.s32.totalorder %s25, 1
      %p242 = por %p240, %p241
      %p243 = scmp.ne.s32.totalorder %s232, %s233
      %p244 = scmp.eq.s32.totalorder %s25, 0
      %p245 = por %p243, %p244
      %p246 = scmp.ne.s32.totalorder %s232, %s233
      %p247 = scmp.eq.s32.totalorder %s26, 1
      %p248 = por %p246, %p247
      %p250 = scmp.ne.s32.totalorder %s233, %s249
      %p251 = scmp.eq.s32.totalorder %s26, 0
      %p252 = por %p250, %p251
      %p253 = scmp.le.s32.totalorder 1, %s20
      %p254 = scmp.lt.s32.totalorder %s20, 3
      %p255 = pnand %p253, %p254
      %p256 = pneg %p255
      // Predicated region
      $region9: #{tpu_custom_call.1} parent=5 // pred_check
        _
      $region10: #{tpu_custom_call.1} parent=5 // pred_check_branch
        %258 = sbr.rel (%p255) target = $region12
      $region11: #{tpu_custom_call.1} parent=5 // pred_region
        %s259 = ssub.s32 %s20, 1
        // Predicated region
        $region13: #{tpu_custom_call.1} parent=11 // pred_check
          %p260 = pneg %p93
        $region14: #{tpu_custom_call.1} parent=11 // pred_check_branch
          %262 = sbr.rel (%p260) target = $region16
        $region15: #{tpu_custom_call.1} parent=11 // pred_region
          _
        $region16: #{tpu_custom_call.1} parent=11 // pred_fallthru
          _
        // Predicated region
        $region17: #{tpu_custom_call.1} parent=11 // pred_check
          %p263 = pneg %p114
        $region18: #{tpu_custom_call.1} parent=11 // pred_check_branch
          %265 = sbr.rel (%p263) target = $region20
        $region19: #{tpu_custom_call.1} parent=11 // pred_region
          _
        $region20: #{tpu_custom_call.1} parent=11 // pred_fallthru
          _
        // Predicated region
        $region21: #{tpu_custom_call.1} parent=11 // pred_check
          %p266 = pneg %p135
        $region22: #{tpu_custom_call.1} parent=11 // pred_check_branch
          %268 = sbr.rel (%p266) target = $region24
        $region23: #{tpu_custom_call.1} parent=11 // pred_region
          _
        $region24: #{tpu_custom_call.1} parent=11 // pred_fallthru
          _
        // Predicated region
        $region25: #{tpu_custom_call.1} parent=11 // pred_check
          %p269 = pneg %p156
        $region26: #{tpu_custom_call.1} parent=11 // pred_check_branch
          %271 = sbr.rel (%p269) target = $region28
        $region27: #{tpu_custom_call.1} parent=11 // pred_region
          _
        $region28: #{tpu_custom_call.1} parent=11 // pred_fallthru
          _
        // Predicated region
        $region29: #{tpu_custom_call.1} parent=11 // pred_check
          %p272 = pneg %p177
        $region30: #{tpu_custom_call.1} parent=11 // pred_check_branch
          %274 = sbr.rel (%p272) target = $region32
        $region31: #{tpu_custom_call.1} parent=11 // pred_region
          _
        $region32: #{tpu_custom_call.1} parent=11 // pred_fallthru
          _
        // Predicated region
        $region33: #{tpu_custom_call.1} parent=11 // pred_check
          %p275 = pneg %p198
        $region34: #{tpu_custom_call.1} parent=11 // pred_check_branch
          %277 = sbr.rel (%p275) target = $region36
        $region35: #{tpu_custom_call.1} parent=11 // pred_region
          _
        $region36: #{tpu_custom_call.1} parent=11 // pred_fallthru
          _
        // Predicated region
        $region37: #{tpu_custom_call.1} parent=11 // pred_check
          %p278 = pneg %p219
        $region38: #{tpu_custom_call.1} parent=11 // pred_check_branch
          %280 = sbr.rel (%p278) target = $region40
        $region39: #{tpu_custom_call.1} parent=11 // pred_region
          _
        $region40: #{tpu_custom_call.1} parent=11 // pred_fallthru
          _
      $region12: #{tpu_custom_call.1} parent=5 // pred_fallthru
        _
      %p281 = scmp.lt.s32.totalorder %s20, 2
      // Predicated region
      $region41: #{tpu_custom_call.1} parent=5 // pred_check
        %p282 = pneg %p281
      $region42: #{tpu_custom_call.1} parent=5 // pred_check_branch
        %284 = sbr.rel (%p282) target = $region44
      $region43: #{tpu_custom_call.1} parent=5 // pred_region
        // Predicated region
        $region45: #{tpu_custom_call.1} parent=43 // pred_check
          %p285 = pneg %p40
        $region46: #{tpu_custom_call.1} parent=43 // pred_check_branch
          %287 = sbr.rel (%p285) target = $region48
        $region47: #{tpu_custom_call.1} parent=43 // pred_region
          %s288 = smul.u32 16, %s20
          %p289 = scmp.lt.s32.totalorder %s288, 31
          %s290 = scalar_select %p289, %s288, 31
          %s291 = smul.addr %s290, 8
          %s292 = scalar_lea.vmem %s0, %s291
          %s293 = smul.u32 16, %s20
        $region48: #{tpu_custom_call.1} parent=43 // pred_fallthru
          _
        // Predicated region
        $region49: #{tpu_custom_call.1} parent=43 // pred_check
          %p294 = pneg %p66
        $region50: #{tpu_custom_call.1} parent=43 // pred_check_branch
          %296 = sbr.rel (%p294) target = $region52
        $region51: #{tpu_custom_call.1} parent=43 // pred_region
          %s297 = smul.u32 16, %s20
          %p298 = scmp.lt.s32.totalorder %s297, 31
          %s299 = scalar_select %p298, %s297, 31
          %s300 = smul.addr %s299, 8
          %s301 = scalar_lea.vmem %s1, %s300
          %s302 = smul.u32 16, %s20
        $region52: #{tpu_custom_call.1} parent=43 // pred_fallthru
          _
      $region44: #{tpu_custom_call.1} parent=5 // pred_fallthru
        _
      %p303 = scmp.le.s32.totalorder 1, %s20
      %p304 = scmp.lt.s32.totalorder %s20, 3
      %p305 = pnand %p303, %p304
      %p306 = pneg %p305
      // Predicated region
      $region53: #{tpu_custom_call.1} parent=5 // pred_check
        _
      $region54: #{tpu_custom_call.1} parent=5 // pred_check_branch
        %308 = sbr.rel (%p305) target = $region56
      $region55: #{tpu_custom_call.1} parent=5 // pred_region
        %s309 = ssub.s32 %s20, 1
        %s310 = smul.u32 16, %s25
        %p311 = scmp.lt.s32.totalorder %s310, 31
        %s312 = scalar_select %p311, %s310, 31
        %s313 = smul.addr %s312, 8
        %s314 = scalar_lea.vmem %s0, %s313
        %p315 = pneg %p46
        %p316 = pneg %p43
        %s317 = smul.u32 16, %s25
        %p318 = scmp.lt.s32.totalorder %s317, 31
        %s319 = scalar_select %p318, %s317, 31
        %s320 = smul.addr %s319, 8
        %s321 = scalar_lea.vmem %s1, %s320
        %p322 = pneg %p72
        %p323 = pneg %p69
        %p324 = pneg %p93
        %p325 = pneg %p90
        %p326 = pneg %p114
        %p327 = pneg %p111
        %p328 = pneg %p135
        %p329 = pneg %p132
        %p330 = pneg %p156
        %p331 = pneg %p153
        %p332 = pneg %p177
        %p333 = pneg %p174
        %p334 = pneg %p198
        %p335 = pneg %p195
        %p336 = pneg %p219
        %p337 = pneg %p216
        %p338 = pneg %p245
        %p339 = pneg %p242
        %s340 = sand.u32 %s232, 1
        %s341 = scalar_lea.sflag [#allocation4], %s340
        %s342 = sand.u32 %s232, 1
        %s343 = scalar_lea.vmem [#allocation3], %s342
        %s344 = smul.u32 16, %s25
        %p345 = scmp.lt.s32.totalorder %s344, 31
        %s346 = scalar_select %p345, %s344, 31
        %s347 = smul.addr %s346, 8
        %s348 = scalar_lea.vmem %s0, %s347
        %s349 = smul.u32 16, %s25
        %s350 = smul.u32 16, %s25
        %p351 = scmp.lt.s32.totalorder %s350, 31
        %s352 = scalar_select %p351, %s350, 31
        %s353 = smul.addr %s352, 8
        %s354 = scalar_lea.vmem %s1, %s353
        %s355 = smul.u32 16, %s25
        %v356 = vld [vmem:[%s348] sm:$0xff]
        %v357 = vld [vmem:[%s348 + $0x8] sm:$0xff]
        %v358 = vld [vmem:[%s348 + $0x10] sm:$0xff]
        %v359 = vld [vmem:[%s348 + $0x18] sm:$0xff]
        %v360 = vld [vmem:[%s348 + $0x20] sm:$0xff]
        %v361 = vld [vmem:[%s348 + $0x28] sm:$0xff]
        %v362 = vld [vmem:[%s348 + $0x30] sm:$0xff]
        %v363 = vld [vmem:[%s348 + $0x38] sm:$0xff]
        %v364 = vld [vmem:[%s348 + $0x40] sm:$0xff]
        %v365 = vld [vmem:[%s348 + $0x48] sm:$0xff]
        %v366 = vld [vmem:[%s348 + $0x50] sm:$0xff]
        %v367 = vld [vmem:[%s348 + $0x58] sm:$0xff]
        %v368 = vld [vmem:[%s348 + $0x60] sm:$0xff]
        %v369 = vld [vmem:[%s348 + $0x68] sm:$0xff]
        %v370 = vld [vmem:[%s348 + $0x70] sm:$0xff]
        %v371 = vld [vmem:[%s348 + $0x78] sm:$0xff]
        %v372 = vld [vmem:[%s2] sm:$0xff]
        %v373 = vld [vmem:[%s2 + $0x8] sm:$0xff]
        %v374 = vld [vmem:[%s2 + $0x10] sm:$0xff]
        %v375 = vld [vmem:[%s354] sm:$0xff]
        %v376 = vld [vmem:[%s354 + $0x8] sm:$0xff]
        %v377 = vld [vmem:[%s354 + $0x10] sm:$0xff]
        %v378 = vld [vmem:[%s354 + $0x18] sm:$0xff]
        %v379 = vld [vmem:[%s354 + $0x20] sm:$0xff]
        %v380 = vld [vmem:[%s354 + $0x28] sm:$0xff]
        %v381 = vld [vmem:[%s354 + $0x30] sm:$0xff]
        %v382 = vld [vmem:[%s354 + $0x38] sm:$0xff]
        %v383 = vld [vmem:[%s354 + $0x40] sm:$0xff]
        %v384 = vld [vmem:[%s354 + $0x48] sm:$0xff]
        %v385 = vld [vmem:[%s354 + $0x50] sm:$0xff]
        %v386 = vld [vmem:[%s354 + $0x58] sm:$0xff]
        %v387 = vld [vmem:[%s354 + $0x60] sm:$0xff]
        %v388 = vld [vmem:[%s354 + $0x68] sm:$0xff]
        %v389 = vld [vmem:[%s354 + $0x70] sm:$0xff]
        %v390 = vld [vmem:[%s354 + $0x78] sm:$0xff]
        %v391 = vld [vmem:[%s3] sm:$0xff]
        %vm392 = vcmask 64512
        %v394 = vsel %vm392, %v375, 0
        %v397 = vsel %vm392, %v376, 0
        %v400 = vsel %vm392, %v377, 0
        %v403 = vsel %vm392, %v378, 0
        %v406 = vsel %vm392, %v379, 0
        %v409 = vsel %vm392, %v380, 0
        %v412 = vsel %vm392, %v381, 0
        %v415 = vsel %vm392, %v382, 0
        %v418 = vsel %vm392, %v383, 0
        %v421 = vsel %vm392, %v384, 0
        %v424 = vsel %vm392, %v385, 0
        %v427 = vsel %vm392, %v386, 0
        %v430 = vsel %vm392, %v387, 0
        %v433 = vsel %vm392, %v388, 0
        %v436 = vsel %vm392, %v389, 0
        %v439 = vsel %vm392, %v390, 0
        %441 = vmatprep.subr.mxu0 0.0
        %442 = vmatpush1.msra.mxu0 0.0
        %443 = vmatprep.subr.mxu0 0.0
        %444 = vmatpush1.msra.mxu0 0.0
        %445 = vmatprep.subr.mxu0 0.0
        %446 = vmatpush1.msra.mxu0 0.0
        %447 = vmatprep.subr.mxu0 0.0
        %448 = vmatpush1.msra.mxu0 0.0
        %449 = vmatprep.subr.mxu0 0.0
        %450 = vmatpush1.msra.mxu0 0.0
        %451 = vmatprep.subr.mxu0 0.0
        %452 = vmatpush1.msra.mxu0 0.0
        %453 = vmatprep.subr.mxu0 0.0
        %454 = vmatpush1.msra.mxu0 0.0
        %455 = vmatprep.subr.mxu0 0.0
        %456 = vmatpush1.msra.mxu0 0.0
        %457 = vmatprep.subr.mxu0 0.0
        %458 = vmatpush1.msra.mxu0 0.0
        %459 = vmatprep.subr.mxu0 0.0
        %460 = vmatpush1.msra.mxu0 0.0
        %461 = vmatprep.subr.mxu0 0.0
        %462 = vmatpush1.msra.mxu0 0.0
        %463 = vmatprep.subr.mxu0 0.0
        %464 = vmatpush1.msra.mxu0 0.0
        %465 = vmatprep.subr.mxu0 0.0
        %466 = vmatpush1.msra.mxu0 0.0
        %467 = vmatprep.subr.mxu0 0.0
        %468 = vmatpush1.msra.mxu0 0.0
        %469 = vmatprep.subr.mxu0 0.0
        %470 = vmatpush1.msra.mxu0 0.0
        %471 = vmatprep.subr.mxu0 0.0
        %472 = vmatpush1.msra.mxu0 %v391
        %473 = vmatprep.subr.mxu0 0.0
        %474 = vmatpush2.msra.mxu0 0.0
        %475 = vmatprep.subr.mxu0 0.0
        %476 = vmatpush2.msra.mxu0 0.0
        %477 = vmatprep.subr.mxu0 0.0
        %478 = vmatpush2.msra.mxu0 0.0
        %479 = vmatprep.subr.mxu0 0.0
        %480 = vmatpush2.msra.mxu0 0.0
        %481 = vmatprep.subr.mxu0 0.0
        %482 = vmatpush2.msra.mxu0 0.0
        %483 = vmatprep.subr.mxu0 0.0
        %484 = vmatpush2.msra.mxu0 0.0
        %485 = vmatprep.subr.mxu0 0.0
        %486 = vmatpush2.msra.mxu0 0.0
        %487 = vmatprep.subr.mxu0 0.0
        %488 = vmatpush2.msra.mxu0 0.0
        %489 = vmatprep.subr.mxu0 0.0
        %490 = vmatpush2.msra.mxu0 0.0
        %491 = vmatprep.subr.mxu0 0.0
        %492 = vmatpush2.msra.mxu0 0.0
        %493 = vmatprep.subr.mxu0 0.0
        %494 = vmatpush2.msra.mxu0 0.0
        %495 = vmatprep.subr.mxu0 0.0
        %496 = vmatpush2.msra.mxu0 0.0
        %497 = vmatprep.subr.mxu0 0.0
        %498 = vmatpush2.msra.mxu0 0.0
        %499 = vmatprep.subr.mxu0 0.0
        %500 = vmatpush2.msra.mxu0 0.0
        %501 = vmatprep.subr.mxu0 0.0
        %502 = vmatpush2.msra.mxu0 0.0
        %503 = vmatprep.subr.mxu0 0.0
        %504 = vmatpush2.msra.mxu0 0.0
        %505 = vmatprep.mubr.f32.mxu0 0.0
        %506 = vmatmul.mubr.f32.gmra.mxu0 %v394
        %v507 = vpop.f32.mrf.mxu0
        %v508 = vadd.f32 0.0, %v507
        %v509 = vpop.f32.mrf.mxu0
        %510 = vmatprep.mubr.f32.mxu0 0.0
        %511 = vmatmul.mubr.f32.gmra.mxu0 %v397
        %v512 = vpop.f32.mrf.mxu0
        %v513 = vadd.f32 0.0, %v512
        %v514 = vpop.f32.mrf.mxu0
        %515 = vmatprep.mubr.f32.mxu0 0.0
        %516 = vmatmul.mubr.f32.gmra.mxu0 %v400
        %v517 = vpop.f32.mrf.mxu0
        %v518 = vadd.f32 0.0, %v517
        %v519 = vpop.f32.mrf.mxu0
        %520 = vmatprep.mubr.f32.mxu0 0.0
        %521 = vmatmul.mubr.f32.gmra.mxu0 %v403
        %v522 = vpop.f32.mrf.mxu0
        %v523 = vadd.f32 0.0, %v522
        %v524 = vpop.f32.mrf.mxu0
        %525 = vmatprep.mubr.f32.mxu0 0.0
        %526 = vmatmul.mubr.f32.gmra.mxu0 %v406
        %v527 = vpop.f32.mrf.mxu0
        %v528 = vadd.f32 0.0, %v527
        %v529 = vpop.f32.mrf.mxu0
        %530 = vmatprep.mubr.f32.mxu0 0.0
        %531 = vmatmul.mubr.f32.gmra.mxu0 %v409
        %v532 = vpop.f32.mrf.mxu0
        %v533 = vadd.f32 0.0, %v532
        %v534 = vpop.f32.mrf.mxu0
        %535 = vmatprep.mubr.f32.mxu0 0.0
        %536 = vmatmul.mubr.f32.gmra.mxu0 %v412
        %v537 = vpop.f32.mrf.mxu0
        %v538 = vadd.f32 0.0, %v537
        %v539 = vpop.f32.mrf.mxu0
        %540 = vmatprep.mubr.f32.mxu0 0.0
        %541 = vmatmul.mubr.f32.gmra.mxu0 %v415
        %v542 = vpop.f32.mrf.mxu0
        %v543 = vadd.f32 0.0, %v542
        %v544 = vpop.f32.mrf.mxu0
        %545 = vmatprep.mubr.f32.mxu0 0.0
        %546 = vmatmul.mubr.f32.gmra.mxu0 %v418
        %v547 = vpop.f32.mrf.mxu0
        %v548 = vadd.f32 0.0, %v547
        %v549 = vpop.f32.mrf.mxu0
        %550 = vmatprep.mubr.f32.mxu0 0.0
        %551 = vmatmul.mubr.f32.gmra.mxu0 %v421
        %v552 = vpop.f32.mrf.mxu0
        %v553 = vadd.f32 0.0, %v552
        %v554 = vpop.f32.mrf.mxu0
        %555 = vmatprep.mubr.f32.mxu0 0.0
        %556 = vmatmul.mubr.f32.gmra.mxu0 %v424
        %v557 = vpop.f32.mrf.mxu0
        %v558 = vadd.f32 0.0, %v557
        %v559 = vpop.f32.mrf.mxu0
        %560 = vmatprep.mubr.f32.mxu0 0.0
        %561 = vmatmul.mubr.f32.gmra.mxu0 %v427
        %v562 = vpop.f32.mrf.mxu0
        %v563 = vadd.f32 0.0, %v562
        %v564 = vpop.f32.mrf.mxu0
        %565 = vmatprep.mubr.f32.mxu0 0.0
        %566 = vmatmul.mubr.f32.gmra.mxu0 %v430
        %v567 = vpop.f32.mrf.mxu0
        %v568 = vadd.f32 0.0, %v567
        %v569 = vpop.f32.mrf.mxu0
        %570 = vmatprep.mubr.f32.mxu0 0.0
        %571 = vmatmul.mubr.f32.gmra.mxu0 %v433
        %v572 = vpop.f32.mrf.mxu0
        %v573 = vadd.f32 0.0, %v572
        %v574 = vpop.f32.mrf.mxu0
        %575 = vmatprep.mubr.f32.mxu0 0.0
        %576 = vmatmul.mubr.f32.gmra.mxu0 %v436
        %v577 = vpop.f32.mrf.mxu0
        %v578 = vadd.f32 0.0, %v577
        %v579 = vpop.f32.mrf.mxu0
        %580 = vmatprep.mubr.f32.mxu0 0.0
        %581 = vmatmul.mubr.f32.gmra.mxu0 %v439
        %v582 = vpop.f32.mrf.mxu0
        %v583 = vadd.f32 0.0, %v582
        %v584 = vpop.f32.mrf.mxu0
        %585 = vdwg.mxu0
        %vm586 = vcmask 195584
        %v588 = vsel %vm586, %v356, 0
        %v591 = vsel %vm586, %v357, 0
        %v594 = vsel %vm586, %v358, 0
        %v597 = vsel %vm586, %v359, 0
        %v600 = vsel %vm586, %v360, 0
        %v603 = vsel %vm586, %v361, 0
        %v606 = vsel %vm586, %v362, 0
        %v609 = vsel %vm586, %v363, 0
        %v612 = vsel %vm586, %v364, 0
        %v615 = vsel %vm586, %v365, 0
        %v618 = vsel %vm586, %v366, 0
        %v621 = vsel %vm586, %v367, 0
        %v624 = vsel %vm586, %v368, 0
        %v627 = vsel %vm586, %v369, 0
        %v630 = vsel %vm586, %v370, 0
        %v633 = vsel %vm586, %v371, 0
        %635 = vmatprep.subr.mxu0 0.0
        %636 = vmatpush1.msra.mxu0 0.0
        %637 = vmatprep.subr.mxu0 0.0
        %638 = vmatpush1.msra.mxu0 0.0
        %639 = vmatprep.subr.mxu0 0.0
        %640 = vmatpush1.msra.mxu0 0.0
        %641 = vmatprep.subr.mxu0 0.0
        %642 = vmatpush1.msra.mxu0 0.0
        %643 = vmatprep.subr.mxu0 0.0
        %644 = vmatpush1.msra.mxu0 0.0
        %645 = vmatprep.subr.mxu0 0.0
        %646 = vmatpush1.msra.mxu0 0.0
        %647 = vmatprep.subr.mxu0 0.0
        %648 = vmatpush1.msra.mxu0 0.0
        %649 = vmatprep.subr.mxu0 0.0
        %650 = vmatpush1.msra.mxu0 0.0
        %651 = vmatprep.subr.mxu0 0.0
        %652 = vmatpush1.msra.mxu0 0.0
        %653 = vmatprep.subr.mxu0 0.0
        %654 = vmatpush1.msra.mxu0 0.0
        %655 = vmatprep.subr.mxu0 0.0
        %656 = vmatpush1.msra.mxu0 0.0
        %657 = vmatprep.subr.mxu0 0.0
        %658 = vmatpush1.msra.mxu0 0.0
        %659 = vmatprep.subr.mxu0 0.0
        %660 = vmatpush1.msra.mxu0 0.0
        %661 = vmatprep.subr.mxu0 0.0
        %662 = vmatpush1.msra.mxu0 %v374
        %663 = vmatprep.subr.mxu0 0.0
        %664 = vmatpush1.msra.mxu0 %v373
        %665 = vmatprep.subr.mxu0 0.0
        %666 = vmatpush1.msra.mxu0 %v372
        %667 = vmatprep.subr.mxu0 0.0
        %668 = vmatpush2.msra.mxu0 0.0
        %669 = vmatprep.subr.mxu0 0.0
        %670 = vmatpush2.msra.mxu0 0.0
        %671 = vmatprep.subr.mxu0 0.0
        %672 = vmatpush2.msra.mxu0 0.0
        %673 = vmatprep.subr.mxu0 0.0
        %674 = vmatpush2.msra.mxu0 0.0
        %675 = vmatprep.subr.mxu0 0.0
        %676 = vmatpush2.msra.mxu0 0.0
        %677 = vmatprep.subr.mxu0 0.0
        %678 = vmatpush2.msra.mxu0 0.0
        %679 = vmatprep.subr.mxu0 0.0
        %680 = vmatpush2.msra.mxu0 0.0
        %681 = vmatprep.subr.mxu0 0.0
        %682 = vmatpush2.msra.mxu0 0.0
        %683 = vmatprep.subr.mxu0 0.0
        %684 = vmatpush2.msra.mxu0 0.0
        %685 = vmatprep.subr.mxu0 0.0
        %686 = vmatpush2.msra.mxu0 0.0
        %687 = vmatprep.subr.mxu0 0.0
        %688 = vmatpush2.msra.mxu0 0.0
        %689 = vmatprep.subr.mxu0 0.0
        %690 = vmatpush2.msra.mxu0 0.0
        %691 = vmatprep.subr.mxu0 0.0
        %692 = vmatpush2.msra.mxu0 0.0
        %693 = vmatprep.subr.mxu0 0.0
        %694 = vmatpush2.msra.mxu0 0.0
        %695 = vmatprep.subr.mxu0 0.0
        %696 = vmatpush2.msra.mxu0 0.0
        %697 = vmatprep.subr.mxu0 0.0
        %698 = vmatpush2.msra.mxu0 0.0
        %699 = vmatprep.mubr.f32.mxu0 0.0
        %700 = vmatmul.mubr.f32.gmra.mxu0 %v588
        %v701 = vpop.f32.mrf.mxu0
        %v702 = vadd.f32 %v508, %v701
        %v703 = vpop.f32.mrf.mxu0
        %704 = vmatprep.mubr.f32.mxu0 0.0
        %705 = vmatmul.mubr.f32.gmra.mxu0 %v591
        %v706 = vpop.f32.mrf.mxu0
        %v707 = vadd.f32 %v513, %v706
        %v708 = vpop.f32.mrf.mxu0
        %709 = vmatprep.mubr.f32.mxu0 0.0
        %710 = vmatmul.mubr.f32.gmra.mxu0 %v594
        %v711 = vpop.f32.mrf.mxu0
        %v712 = vadd.f32 %v518, %v711
        %v713 = vpop.f32.mrf.mxu0
        %714 = vmatprep.mubr.f32.mxu0 0.0
        %715 = vmatmul.mubr.f32.gmra.mxu0 %v597
        %v716 = vpop.f32.mrf.mxu0
        %v717 = vadd.f32 %v523, %v716
        %v718 = vpop.f32.mrf.mxu0
        %719 = vmatprep.mubr.f32.mxu0 0.0
        %720 = vmatmul.mubr.f32.gmra.mxu0 %v600
        %v721 = vpop.f32.mrf.mxu0
        %v722 = vadd.f32 %v528, %v721
        %v723 = vpop.f32.mrf.mxu0
        %724 = vmatprep.mubr.f32.mxu0 0.0
        %725 = vmatmul.mubr.f32.gmra.mxu0 %v603
        %v726 = vpop.f32.mrf.mxu0
        %v727 = vadd.f32 %v533, %v726
        %v728 = vpop.f32.mrf.mxu0
        %729 = vmatprep.mubr.f32.mxu0 0.0
        %730 = vmatmul.mubr.f32.gmra.mxu0 %v606
        %v731 = vpop.f32.mrf.mxu0
        %v732 = vadd.f32 %v538, %v731
        %v733 = vpop.f32.mrf.mxu0
        %734 = vmatprep.mubr.f32.mxu0 0.0
        %735 = vmatmul.mubr.f32.gmra.mxu0 %v609
        %v736 = vpop.f32.mrf.mxu0
        %v737 = vadd.f32 %v543, %v736
        %v738 = vpop.f32.mrf.mxu0
        %739 = vmatprep.mubr.f32.mxu0 0.0
        %740 = vmatmul.mubr.f32.gmra.mxu0 %v612
        %v741 = vpop.f32.mrf.mxu0
        %v742 = vadd.f32 %v548, %v741
        %v743 = vpop.f32.mrf.mxu0
        %744 = vmatprep.mubr.f32.mxu0 0.0
        %745 = vmatmul.mubr.f32.gmra.mxu0 %v615
        %v746 = vpop.f32.mrf.mxu0
        %v747 = vadd.f32 %v553, %v746
        %v748 = vpop.f32.mrf.mxu0
        %749 = vmatprep.mubr.f32.mxu0 0.0
        %750 = vmatmul.mubr.f32.gmra.mxu0 %v618
        %v751 = vpop.f32.mrf.mxu0
        %v752 = vadd.f32 %v558, %v751
        %v753 = vpop.f32.mrf.mxu0
        %754 = vmatprep.mubr.f32.mxu0 0.0
        %755 = vmatmul.mubr.f32.gmra.mxu0 %v621
        %v756 = vpop.f32.mrf.mxu0
        %v757 = vadd.f32 %v563, %v756
        %v758 = vpop.f32.mrf.mxu0
        %759 = vmatprep.mubr.f32.mxu0 0.0
        %760 = vmatmul.mubr.f32.gmra.mxu0 %v624
        %v761 = vpop.f32.mrf.mxu0
        %v762 = vadd.f32 %v568, %v761
        %v763 = vpop.f32.mrf.mxu0
        %764 = vmatprep.mubr.f32.mxu0 0.0
        %765 = vmatmul.mubr.f32.gmra.mxu0 %v627
        %v766 = vpop.f32.mrf.mxu0
        %v767 = vadd.f32 %v573, %v766
        %v768 = vpop.f32.mrf.mxu0
        %769 = vmatprep.mubr.f32.mxu0 0.0
        %770 = vmatmul.mubr.f32.gmra.mxu0 %v630
        %v771 = vpop.f32.mrf.mxu0
        %v772 = vadd.f32 %v578, %v771
        %v773 = vpop.f32.mrf.mxu0
        %774 = vmatprep.mubr.f32.mxu0 0.0
        %775 = vmatmul.mubr.f32.gmra.mxu0 %v633
        %v776 = vpop.f32.mrf.mxu0
        %v777 = vadd.f32 %v583, %v776
        %v778 = vpop.f32.mrf.mxu0
        %779 = vdwg.mxu0
        %v780 = vld [vmem:[%s4] sm:$0x1]
        %v782 = vlaneseq
        %v783 = vshrl.u32 %v782, 7
        %v784 = vsub.s32 0, %v783
        %v785 = vrot.slane %v780, %v784
        %v787 = vadd.f32 %v702, %v785
        %v788 = vadd.f32 %v707, %v785
        %v789 = vadd.f32 %v712, %v785
        %v790 = vadd.f32 %v717, %v785
        %v791 = vadd.f32 %v722, %v785
        %v792 = vadd.f32 %v727, %v785
        %v793 = vadd.f32 %v732, %v785
        %v794 = vadd.f32 %v737, %v785
        %v795 = vadd.f32 %v742, %v785
        %v796 = vadd.f32 %v747, %v785
        %v797 = vadd.f32 %v752, %v785
        %v798 = vadd.f32 %v757, %v785
        %v799 = vadd.f32 %v762, %v785
        %v800 = vadd.f32 %v767, %v785
        %v801 = vadd.f32 %v772, %v785
        %v802 = vadd.f32 %v777, %v785
        %v803 = vmax.f32 %v787, 0.0
        %v804 = vmax.f32 %v788, 0.0
        %v805 = vmax.f32 %v789, 0.0
        %v806 = vmax.f32 %v790, 0.0
        %v807 = vmax.f32 %v791, 0.0
        %v808 = vmax.f32 %v792, 0.0
        %v809 = vmax.f32 %v793, 0.0
        %v810 = vmax.f32 %v794, 0.0
        %v811 = vmax.f32 %v795, 0.0
        %v812 = vmax.f32 %v796, 0.0
        %v813 = vmax.f32 %v797, 0.0
        %v814 = vmax.f32 %v798, 0.0
        %v815 = vmax.f32 %v799, 0.0
        %v816 = vmax.f32 %v800, 0.0
        %v817 = vmax.f32 %v801, 0.0
        %v818 = vmax.f32 %v802, 0.0
        %v819 = vld [vmem:[%s5] sm:$0xff]
        %v820 = vld [vmem:[%s5 + $0x8] sm:$0xff]
        %v821 = vld [vmem:[%s5 + $0x10] sm:$0xff]
        %v822 = vld [vmem:[%s5 + $0x18] sm:$0xff]
        %v823 = vld [vmem:[%s5 + $0x20] sm:$0xff]
        %v824 = vld [vmem:[%s5 + $0x28] sm:$0xff]
        %v825 = vld [vmem:[%s5 + $0x30] sm:$0xff]
        %v826 = vld [vmem:[%s5 + $0x38] sm:$0xff]
        %v827 = vld [vmem:[%s6] sm:$0x1]
        %v829 = vlaneseq
        %v830 = vshrl.u32 %v829, 7
        %v831 = vsub.s32 0, %v830
        %v832 = vrot.slane %v827, %v831
        %vm834 = vcmask 523264
        %v836 = vsel %vm834, %v803, 0
        %v839 = vsel %vm834, %v804, 0
        %v842 = vsel %vm834, %v805, 0
        %v845 = vsel %vm834, %v806, 0
        %v848 = vsel %vm834, %v807, 0
        %v851 = vsel %vm834, %v808, 0
        %v854 = vsel %vm834, %v809, 0
        %v857 = vsel %vm834, %v810, 0
        %v860 = vsel %vm834, %v811, 0
        %v863 = vsel %vm834, %v812, 0
        %v866 = vsel %vm834, %v813, 0
        %v869 = vsel %vm834, %v814, 0
        %v872 = vsel %vm834, %v815, 0
        %v875 = vsel %vm834, %v816, 0
        %v878 = vsel %vm834, %v817, 0
        %v881 = vsel %vm834, %v818, 0
        %883 = vmatprep.subr.mxu0 0.0
        %884 = vmatpush1.msra.mxu0 0.0
        %885 = vmatprep.subr.mxu0 0.0
        %886 = vmatpush1.msra.mxu0 0.0
        %887 = vmatprep.subr.mxu0 0.0
        %888 = vmatpush1.msra.mxu0 0.0
        %889 = vmatprep.subr.mxu0 0.0
        %890 = vmatpush1.msra.mxu0 0.0
        %891 = vmatprep.subr.mxu0 0.0
        %892 = vmatpush1.msra.mxu0 0.0
        %893 = vmatprep.subr.mxu0 0.0
        %894 = vmatpush1.msra.mxu0 0.0
        %895 = vmatprep.subr.mxu0 0.0
        %896 = vmatpush1.msra.mxu0 0.0
        %897 = vmatprep.subr.mxu0 0.0
        %898 = vmatpush1.msra.mxu0 0.0
        %899 = vmatprep.subr.mxu0 0.0
        %900 = vmatpush1.msra.mxu0 %v826
        %901 = vmatprep.subr.mxu0 0.0
        %902 = vmatpush1.msra.mxu0 %v825
        %903 = vmatprep.subr.mxu0 0.0
        %904 = vmatpush1.msra.mxu0 %v824
        %905 = vmatprep.subr.mxu0 0.0
        %906 = vmatpush1.msra.mxu0 %v823
        %907 = vmatprep.subr.mxu0 0.0
        %908 = vmatpush1.msra.mxu0 %v822
        %909 = vmatprep.subr.mxu0 0.0
        %910 = vmatpush1.msra.mxu0 %v821
        %911 = vmatprep.subr.mxu0 0.0
        %912 = vmatpush1.msra.mxu0 %v820
        %913 = vmatprep.subr.mxu0 0.0
        %914 = vmatpush1.msra.mxu0 %v819
        %915 = vmatprep.subr.mxu0 0.0
        %916 = vmatpush2.msra.mxu0 0.0
        %917 = vmatprep.subr.mxu0 0.0
        %918 = vmatpush2.msra.mxu0 0.0
        %919 = vmatprep.subr.mxu0 0.0
        %920 = vmatpush2.msra.mxu0 0.0
        %921 = vmatprep.subr.mxu0 0.0
        %922 = vmatpush2.msra.mxu0 0.0
        %923 = vmatprep.subr.mxu0 0.0
        %924 = vmatpush2.msra.mxu0 0.0
        %925 = vmatprep.subr.mxu0 0.0
        %926 = vmatpush2.msra.mxu0 0.0
        %927 = vmatprep.subr.mxu0 0.0
        %928 = vmatpush2.msra.mxu0 0.0
        %929 = vmatprep.subr.mxu0 0.0
        %930 = vmatpush2.msra.mxu0 0.0
        %931 = vmatprep.subr.mxu0 0.0
        %932 = vmatpush2.msra.mxu0 0.0
        %933 = vmatprep.subr.mxu0 0.0
        %934 = vmatpush2.msra.mxu0 0.0
        %935 = vmatprep.subr.mxu0 0.0
        %936 = vmatpush2.msra.mxu0 0.0
        %937 = vmatprep.subr.mxu0 0.0
        %938 = vmatpush2.msra.mxu0 0.0
        %939 = vmatprep.subr.mxu0 0.0
        %940 = vmatpush2.msra.mxu0 0.0
        %941 = vmatprep.subr.mxu0 0.0
        %942 = vmatpush2.msra.mxu0 0.0
        %943 = vmatprep.subr.mxu0 0.0
        %944 = vmatpush2.msra.mxu0 0.0
        %945 = vmatprep.subr.mxu0 0.0
        %946 = vmatpush2.msra.mxu0 0.0
        %947 = vmatprep.mubr.f32.mxu0 0.0
        %948 = vmatmul.mubr.f32.gmra.mxu0 %v836
        %v949 = vpop.f32.mrf.mxu0
        %v950 = vadd.f32 %v832, %v949
        %v951 = vpop.f32.mrf.mxu0
        %952 = vmatprep.mubr.f32.mxu0 0.0
        %953 = vmatmul.mubr.f32.gmra.mxu0 %v839
        %v954 = vpop.f32.mrf.mxu0
        %v955 = vadd.f32 %v832, %v954
        %v956 = vpop.f32.mrf.mxu0
        %957 = vmatprep.mubr.f32.mxu0 0.0
        %958 = vmatmul.mubr.f32.gmra.mxu0 %v842
        %v959 = vpop.f32.mrf.mxu0
        %v960 = vadd.f32 %v832, %v959
        %v961 = vpop.f32.mrf.mxu0
        %962 = vmatprep.mubr.f32.mxu0 0.0
        %963 = vmatmul.mubr.f32.gmra.mxu0 %v845
        %v964 = vpop.f32.mrf.mxu0
        %v965 = vadd.f32 %v832, %v964
        %v966 = vpop.f32.mrf.mxu0
        %967 = vmatprep.mubr.f32.mxu0 0.0
        %968 = vmatmul.mubr.f32.gmra.mxu0 %v848
        %v969 = vpop.f32.mrf.mxu0
        %v970 = vadd.f32 %v832, %v969
        %v971 = vpop.f32.mrf.mxu0
        %972 = vmatprep.mubr.f32.mxu0 0.0
        %973 = vmatmul.mubr.f32.gmra.mxu0 %v851
        %v974 = vpop.f32.mrf.mxu0
        %v975 = vadd.f32 %v832, %v974
        %v976 = vpop.f32.mrf.mxu0
        %977 = vmatprep.mubr.f32.mxu0 0.0
        %978 = vmatmul.mubr.f32.gmra.mxu0 %v854
        %v979 = vpop.f32.mrf.mxu0
        %v980 = vadd.f32 %v832, %v979
        %v981 = vpop.f32.mrf.mxu0
        %982 = vmatprep.mubr.f32.mxu0 0.0
        %983 = vmatmul.mubr.f32.gmra.mxu0 %v857
        %v984 = vpop.f32.mrf.mxu0
        %v985 = vadd.f32 %v832, %v984
        %v986 = vpop.f32.mrf.mxu0
        %987 = vmatprep.mubr.f32.mxu0 0.0
        %988 = vmatmul.mubr.f32.gmra.mxu0 %v860
        %v989 = vpop.f32.mrf.mxu0
        %v990 = vadd.f32 %v832, %v989
        %v991 = vpop.f32.mrf.mxu0
        %992 = vmatprep.mubr.f32.mxu0 0.0
        %993 = vmatmul.mubr.f32.gmra.mxu0 %v863
        %v994 = vpop.f32.mrf.mxu0
        %v995 = vadd.f32 %v832, %v994
        %v996 = vpop.f32.mrf.mxu0
        %997 = vmatprep.mubr.f32.mxu0 0.0
        %998 = vmatmul.mubr.f32.gmra.mxu0 %v866
        %v999 = vpop.f32.mrf.mxu0
        %v1000 = vadd.f32 %v832, %v999
        %v1001 = vpop.f32.mrf.mxu0
        %1002 = vmatprep.mubr.f32.mxu0 0.0
        %1003 = vmatmul.mubr.f32.gmra.mxu0 %v869
        %v1004 = vpop.f32.mrf.mxu0
        %v1005 = vadd.f32 %v832, %v1004
        %v1006 = vpop.f32.mrf.mxu0
        %1007 = vmatprep.mubr.f32.mxu0 0.0
        %1008 = vmatmul.mubr.f32.gmra.mxu0 %v872
        %v1009 = vpop.f32.mrf.mxu0
        %v1010 = vadd.f32 %v832, %v1009
        %v1011 = vpop.f32.mrf.mxu0
        %1012 = vmatprep.mubr.f32.mxu0 0.0
        %1013 = vmatmul.mubr.f32.gmra.mxu0 %v875
        %v1014 = vpop.f32.mrf.mxu0
        %v1015 = vadd.f32 %v832, %v1014
        %v1016 = vpop.f32.mrf.mxu0
        %1017 = vmatprep.mubr.f32.mxu0 0.0
        %1018 = vmatmul.mubr.f32.gmra.mxu0 %v878
        %v1019 = vpop.f32.mrf.mxu0
        %v1020 = vadd.f32 %v832, %v1019
        %v1021 = vpop.f32.mrf.mxu0
        %1022 = vmatprep.mubr.f32.mxu0 0.0
        %1023 = vmatmul.mubr.f32.gmra.mxu0 %v881
        %v1024 = vpop.f32.mrf.mxu0
        %v1025 = vadd.f32 %v832, %v1024
        %v1026 = vpop.f32.mrf.mxu0
        %1027 = vdwg.mxu0
        %v1028 = vmax.f32 %v950, 0.0
        %v1029 = vmax.f32 %v955, 0.0
        %v1030 = vmax.f32 %v960, 0.0
        %v1031 = vmax.f32 %v965, 0.0
        %v1032 = vmax.f32 %v970, 0.0
        %v1033 = vmax.f32 %v975, 0.0
        %v1034 = vmax.f32 %v980, 0.0
        %v1035 = vmax.f32 %v985, 0.0
        %v1036 = vmax.f32 %v990, 0.0
        %v1037 = vmax.f32 %v995, 0.0
        %v1038 = vmax.f32 %v1000, 0.0
        %v1039 = vmax.f32 %v1005, 0.0
        %v1040 = vmax.f32 %v1010, 0.0
        %v1041 = vmax.f32 %v1015, 0.0
        %v1042 = vmax.f32 %v1020, 0.0
        %v1043 = vmax.f32 %v1025, 0.0
        %v1044 = vld [vmem:[%s7] sm:$0x1]
        %v1046 = vlaneseq
        %v1047 = vshrl.u32 %v1046, 7
        %v1048 = vsub.s32 0, %v1047
        %v1049 = vrot.slane %v1044, %v1048
        %v1051 = vmul.f32 %v1028, %v1049
        %v1052 = vmul.f32 %v1029, %v1049
        %v1053 = vmul.f32 %v1030, %v1049
        %v1054 = vmul.f32 %v1031, %v1049
        %v1055 = vmul.f32 %v1032, %v1049
        %v1056 = vmul.f32 %v1033, %v1049
        %v1057 = vmul.f32 %v1034, %v1049
        %v1058 = vmul.f32 %v1035, %v1049
        %v1059 = vmul.f32 %v1036, %v1049
        %v1060 = vmul.f32 %v1037, %v1049
        %v1061 = vmul.f32 %v1038, %v1049
        %v1062 = vmul.f32 %v1039, %v1049
        %v1063 = vmul.f32 %v1040, %v1049
        %v1064 = vmul.f32 %v1041, %v1049
        %v1065 = vmul.f32 %v1042, %v1049
        %v1066 = vmul.f32 %v1043, %v1049
        %v1067 = vsel %vm834, %v1051, 0.0
        %1068 = vadd.xlane.f32.xlu0 %v1067
        %v1069 = vpop.xlane.xlu0 %1068
        %v1070 = vsel %vm834, %v1052, 0.0
        %1071 = vadd.xlane.f32.xlu0 %v1070
        %v1072 = vpop.xlane.xlu0 %1071
        %v1073 = vsel %vm834, %v1053, 0.0
        %1074 = vadd.xlane.f32.xlu0 %v1073
        %v1075 = vpop.xlane.xlu0 %1074
        %v1076 = vsel %vm834, %v1054, 0.0
        %1077 = vadd.xlane.f32.xlu0 %v1076
        %v1078 = vpop.xlane.xlu0 %1077
        %v1079 = vsel %vm834, %v1055, 0.0
        %1080 = vadd.xlane.f32.xlu0 %v1079
        %v1081 = vpop.xlane.xlu0 %1080
        %v1082 = vsel %vm834, %v1056, 0.0
        %1083 = vadd.xlane.f32.xlu0 %v1082
        %v1084 = vpop.xlane.xlu0 %1083
        %v1085 = vsel %vm834, %v1057, 0.0
        %1086 = vadd.xlane.f32.xlu0 %v1085
        %v1087 = vpop.xlane.xlu0 %1086
        %v1088 = vsel %vm834, %v1058, 0.0
        %1089 = vadd.xlane.f32.xlu0 %v1088
        %v1090 = vpop.xlane.xlu0 %1089
        %v1091 = vsel %vm834, %v1059, 0.0
        %1092 = vadd.xlane.f32.xlu0 %v1091
        %v1093 = vpop.xlane.xlu0 %1092
        %v1094 = vsel %vm834, %v1060, 0.0
        %1095 = vadd.xlane.f32.xlu0 %v1094
        %v1096 = vpop.xlane.xlu0 %1095
        %v1097 = vsel %vm834, %v1061, 0.0
        %1098 = vadd.xlane.f32.xlu0 %v1097
        %v1099 = vpop.xlane.xlu0 %1098
        %v1100 = vsel %vm834, %v1062, 0.0
        %1101 = vadd.xlane.f32.xlu0 %v1100
        %v1102 = vpop.xlane.xlu0 %1101
        %v1103 = vsel %vm834, %v1063, 0.0
        %1104 = vadd.xlane.f32.xlu0 %v1103
        %v1105 = vpop.xlane.xlu0 %1104
        %v1106 = vsel %vm834, %v1064, 0.0
        %1107 = vadd.xlane.f32.xlu0 %v1106
        %v1108 = vpop.xlane.xlu0 %1107
        %v1109 = vsel %vm834, %v1065, 0.0
        %1110 = vadd.xlane.f32.xlu0 %v1109
        %v1111 = vpop.xlane.xlu0 %1110
        %v1112 = vsel %vm834, %v1066, 0.0
        %1113 = vadd.xlane.f32.xlu0 %v1112
        %v1114 = vpop.xlane.xlu0 %1113
        %v1115 = vld [vmem:[#allocation2] sm:$0x1]
        %1117 = vset.pattern.permute.xlu0 0
        %1118 = vperm.xlu0 %1117, %v1115
        %v1119 = vpop.permute.xlu0 %1118
        %v1121 = vlaneseq
        %v1122 = vshrl.u32 %v1121, 7
        %v1123 = vsub.s32 0, %v1122
        %v1124 = vrot.slane %v1119, %v1123
        %v1125 = vadd.f32 %v1069, %v1124
        %v1126 = vadd.f32 %v1072, %v1124
        %v1127 = vadd.f32 %v1075, %v1124
        %v1128 = vadd.f32 %v1078, %v1124
        %v1129 = vadd.f32 %v1081, %v1124
        %v1130 = vadd.f32 %v1084, %v1124
        %v1131 = vadd.f32 %v1087, %v1124
        %v1132 = vadd.f32 %v1090, %v1124
        %v1133 = vadd.f32 %v1093, %v1124
        %v1134 = vadd.f32 %v1096, %v1124
        %v1135 = vadd.f32 %v1099, %v1124
        %v1136 = vadd.f32 %v1102, %v1124
        %v1137 = vadd.f32 %v1105, %v1124
        %v1138 = vadd.f32 %v1108, %v1124
        %v1139 = vadd.f32 %v1111, %v1124
        %v1140 = vadd.f32 %v1114, %v1124
        %v1157 = vlaneseq
        %v1158 = vand.u32 %v1157, 127
        %v1159 = vlaneseq
        %v1160 = vshrl.u32 %v1159, 7
        %v1161 = vsub.s32 %v1158, %v1160
        %v1162 = vrot.slane %v1125, %v1161
        %v1163 = vadd.s32 %v1158, 4294967288
        %v1164 = vlaneseq
        %v1165 = vshrl.u32 %v1164, 7
        %v1166 = vsub.s32 %v1163, %v1165
        %v1167 = vrot.slane %v1126, %v1166
        %vm1168 = vcmask 130112
        %v1169 = vsel %vm1168, %v1167, %v1162
        %v1170 = vadd.s32 %v1158, 4294967280
        %v1171 = vlaneseq
        %v1172 = vshrl.u32 %v1171, 7
        %v1173 = vsub.s32 %v1170, %v1172
        %v1174 = vrot.slane %v1127, %v1173
        %vm1175 = vcmask 195712
        %v1176 = vsel %vm1175, %v1174, %v1169
        %v1177 = vadd.s32 %v1158, 4294967272
        %v1178 = vlaneseq
        %v1179 = vshrl.u32 %v1178, 7
        %v1180 = vsub.s32 %v1177, %v1179
        %v1181 = vrot.slane %v1128, %v1180
        %vm1182 = vcmask 261312
        %v1183 = vsel %vm1182, %v1181, %v1176
        %v1184 = vadd.s32 %v1158, 4294967264
        %v1185 = vlaneseq
        %v1186 = vshrl.u32 %v1185, 7
        %v1187 = vsub.s32 %v1184, %v1186
        %v1188 = vrot.slane %v1129, %v1187
        %vm1189 = vcmask 326912
        %v1190 = vsel %vm1189, %v1188, %v1183
        %v1191 = vadd.s32 %v1158, 4294967256
        %v1192 = vlaneseq
        %v1193 = vshrl.u32 %v1192, 7
        %v1194 = vsub.s32 %v1191, %v1193
        %v1195 = vrot.slane %v1130, %v1194
        %vm1196 = vcmask 392512
        %v1197 = vsel %vm1196, %v1195, %v1190
        %v1198 = vadd.s32 %v1158, 4294967248
        %v1199 = vlaneseq
        %v1200 = vshrl.u32 %v1199, 7
        %v1201 = vsub.s32 %v1198, %v1200
        %v1202 = vrot.slane %v1131, %v1201
        %vm1203 = vcmask 458112
        %v1204 = vsel %vm1203, %v1202, %v1197
        %v1205 = vadd.s32 %v1158, 4294967240
        %v1206 = vlaneseq
        %v1207 = vshrl.u32 %v1206, 7
        %v1208 = vsub.s32 %v1205, %v1207
        %v1209 = vrot.slane %v1132, %v1208
        %vm1210 = vcmask 523712
        %v1211 = vsel %vm1210, %v1209, %v1204
        %v1212 = vadd.s32 %v1158, 4294967232
        %v1213 = vlaneseq
        %v1214 = vshrl.u32 %v1213, 7
        %v1215 = vsub.s32 %v1212, %v1214
        %v1216 = vrot.slane %v1133, %v1215
        %vm1217 = vcmask 589312
        %v1218 = vsel %vm1217, %v1216, %v1211
        %v1219 = vadd.s32 %v1158, 4294967224
        %v1220 = vlaneseq
        %v1221 = vshrl.u32 %v1220, 7
        %v1222 = vsub.s32 %v1219, %v1221
        %v1223 = vrot.slane %v1134, %v1222
        %vm1224 = vcmask 654912
        %v1225 = vsel %vm1224, %v1223, %v1218
        %v1226 = vadd.s32 %v1158, 4294967216
        %v1227 = vlaneseq
        %v1228 = vshrl.u32 %v1227, 7
        %v1229 = vsub.s32 %v1226, %v1228
        %v1230 = vrot.slane %v1135, %v1229
        %vm1231 = vcmask 720512
        %v1232 = vsel %vm1231, %v1230, %v1225
        %v1233 = vadd.s32 %v1158, 4294967208
        %v1234 = vlaneseq
        %v1235 = vshrl.u32 %v1234, 7
        %v1236 = vsub.s32 %v1233, %v1235
        %v1237 = vrot.slane %v1136, %v1236
        %vm1238 = vcmask 786112
        %v1239 = vsel %vm1238, %v1237, %v1232
        %v1240 = vadd.s32 %v1158, 4294967200
        %v1241 = vlaneseq
        %v1242 = vshrl.u32 %v1241, 7
        %v1243 = vsub.s32 %v1240, %v1242
        %v1244 = vrot.slane %v1137, %v1243
        %vm1245 = vcmask 851712
        %v1246 = vsel %vm1245, %v1244, %v1239
        %v1247 = vadd.s32 %v1158, 4294967192
        %v1248 = vlaneseq
        %v1249 = vshrl.u32 %v1248, 7
        %v1250 = vsub.s32 %v1247, %v1249
        %v1251 = vrot.slane %v1138, %v1250
        %vm1252 = vcmask 917312
        %v1253 = vsel %vm1252, %v1251, %v1246
        %v1254 = vadd.s32 %v1158, 4294967184
        %v1255 = vlaneseq
        %v1256 = vshrl.u32 %v1255, 7
        %v1257 = vsub.s32 %v1254, %v1256
        %v1258 = vrot.slane %v1139, %v1257
        %vm1259 = vcmask 982912
        %v1260 = vsel %vm1259, %v1258, %v1253
        %v1261 = vadd.s32 %v1158, 4294967176
        %v1262 = vlaneseq
        %v1263 = vshrl.u32 %v1262, 7
        %v1264 = vsub.s32 %v1261, %v1263
        %v1265 = vrot.slane %v1140, %v1264
        %vm1266 = vcmask 1048512
        %v1267 = vsel %vm1266, %v1265, %v1260
        %1269 = vst [vmem:[%s343] sm:$0x1] %v1267
        %s1270 = sand.u32 %s232, 1
        %s1271 = scalar_lea.sflag [#allocation4], %s1270
        %s1272 = sand.u32 %s232, 1
        %s1273 = scalar_lea.vmem [#allocation3], %s1272
        // Predicated region
        $region57: #{tpu_custom_call.1} parent=55 // pred_check
          %p1274 = pneg %p242
        $region58: #{tpu_custom_call.1} parent=55 // pred_check_branch
          %1276 = sbr.rel (%p1274) target = $region60
        $region59: #{tpu_custom_call.1} parent=55 // pred_region
          %s1278 = ssub.s32 16, 16
          %1279 = vsyncadd %s1271, %s1278
          %s1280 = smul.addr %s25, 16
          %s1281 = scalar_lea.hbm %s9, %s1280
          %s1283 = sshll.u32 %s1273, 4
          %s1284 = int_to_ptr.vmem [resolvable:$true] %s1283
          %1286 = dma.vmem_to_hbm [thread:$0]  %s1284, 16, %s1281, %s1271
        $region60: #{tpu_custom_call.1} parent=55 // pred_fallthru
          _
      $region56: #{tpu_custom_call.1} parent=5 // pred_fallthru
        _
      %p1287 = scmp.le.s32.totalorder 2, %s20
      // Predicated region
      $region61: #{tpu_custom_call.1} parent=5 // pred_check
        %p1288 = pneg %p1287
      $region62: #{tpu_custom_call.1} parent=5 // pred_check_branch
        %1290 = sbr.rel (%p1288) target = $region64
      $region63: #{tpu_custom_call.1} parent=5 // pred_region
        %s1291 = ssub.s32 %s20, 2
        // Predicated region
        $region65: #{tpu_custom_call.1} parent=63 // pred_check
          %p1292 = pneg %p248
        $region66: #{tpu_custom_call.1} parent=63 // pred_check_branch
          %1294 = sbr.rel (%p1292) target = $region68
        $region67: #{tpu_custom_call.1} parent=63 // pred_region
          %s1295 = sand.u32 %s233, 1
          %s1296 = scalar_lea.sflag [#allocation4], %s1295
          %s1297 = sand.u32 %s233, 1
          %s1298 = scalar_lea.vmem [#allocation3], %s1297
          %1299 = dma.done %s1296, 16
        $region68: #{tpu_custom_call.1} parent=63 // pred_fallthru
          _
      $region64: #{tpu_custom_call.1} parent=5 // pred_fallthru
        _
    $region6: #{tpu_custom_call.1} parent=1 // loop_footer
      %s24 = sadd.s32 1, %s20
    $region7: #{tpu_custom_call.1} parent=1 // loop_footer_branch
      %19 = sbr.rel target = $region3
    $region8: #{tpu_custom_call.1} parent=1 // loop_exit
      _
    %1300 = vsyncpa [#allocation4], 1
    %s1301 = scalar_lea.sflag [#allocation4], 1
    %1302 = vsyncpa %s1301, 1

</llo_original>
